<compile_context>
chip_gen: v5e
topology: v5e:2x2
jax: 0.10.0
libtpu: 0.0.40
codegen_flags: <defaults>
</compile_context>

<pallas_src>
from typing import NamedTuple

import jax
import jax.numpy as jnp
from jax.experimental import pallas as pl
from jax.experimental.pallas import tpu as pltpu


def linear_sub_relu_kernel(x2_ref, w_ref, b_ref, x3_ref, o_ref):
    # v1 = x2 @ W_blockdiag (MXU, f32 accumulate); out = relu(v1 + b - x3)
    v1 = jnp.dot(x2_ref[...], w_ref[...], preferred_element_type=jnp.float32)
    o_ref[...] = jnp.maximum(v1 + b_ref[...] - x3_ref[...], 0.0).astype(o_ref.dtype)


class LinearParams(NamedTuple):
    wt: jax.Array        # [F_in, F_out]            plain transposed weight
    b_row: jax.Array     # [1, F_out]               plain bias row
    w_bd: jax.Array      # [pack*F_in, pack*F_out]  block-diagonal packed weight
    b_packed: jax.Array  # [1, pack*F_out]          lane-tiled bias
    pack: int            # samples packed per repacked row (8 for F=16)


def prepare_params(weight, bias, *, lane=128):
    """One-time parameter layout prep (hoisted out of the per-call path).

    weight: [out, in] as in torch.nn.Linear
    bias:   [out]
    """
    weight = jnp.asarray(weight, jnp.float32)
    bias = jnp.asarray(bias, jnp.float32)
    f_out, f_in = weight.shape
    wt = weight.T                                   # [F_in, F_out]
    b_row = bias.reshape(1, f_out)

    pack = max(1, lane // max(f_in, f_out))         # 8 for 16x16
    # Block-diagonal expansion: kron(I_pack, W^T) -> 128x128 with 8 copies of
    # W^T on the diagonal.  Built exactly once; zero off-diagonal blocks make
    # the packed matmul numerically identical to the per-sample 16x16 matmul.
    w_bd = jnp.kron(jnp.eye(pack, dtype=wt.dtype), wt)
    b_packed = jnp.tile(bias, pack).reshape(1, pack * f_out)
    return LinearParams(wt, b_row, w_bd, b_packed, pack)


def model_forward(x2, x3, params, *, batch_tile_rows=1024, min_pallas_batch=1024,
                  force_pallas=False):
    """relu(x2 @ W^T + b - x3) for x2, x3 of shape [B, 16]."""
    B, f_in = x2.shape
    f_out = params.wt.shape[1]

    # Tiny-batch fast path: let XLA fuse the 16x16 matmul + bias + sub + relu.
    if B < min_pallas_batch and not force_pallas:
        return jnp.maximum(x2 @ params.wt + params.b_row - x3, 0.0)

    pack = params.pack
    lane_in = pack * f_in        # 128
    lane_out = pack * f_out      # 128

    # Repacked-row count and tile choice.
    r_needed = pl.cdiv(B, pack)
    if r_needed >= 16:
        tb = min(batch_tile_rows, r_needed)
        # Ensure >= 2 grid steps (pipelining + both v7x TCs) and 8-row alignment.
        tb = min(tb, pl.cdiv(r_needed, 2))
        tb = max(8, (tb // 8) * 8)
    else:
        tb = r_needed            # single full-extent block (always legal)

    n_blocks = pl.cdiv(r_needed, tb)
    r_padded = n_blocks * tb
    b_padded = r_padded * pack

    if b_padded != B:
        x2 = jnp.pad(x2, ((0, b_padded - B), (0, 0)))
        x3 = jnp.pad(x3, ((0, b_padded - B), (0, 0)))

    # Free row-major reshape: 8 consecutive samples share one 128-lane row.
    x2p = x2.reshape(r_padded, lane_in)
    x3p = x3.reshape(r_padded, lane_out)

    outp = pl.pallas_call(
        linear_sub_relu_kernel,
        out_shape=jax.ShapeDtypeStruct((r_padded, lane_out), jnp.float32),
        grid_spec=pl.GridSpec(
            grid=(n_blocks,),
            in_specs=[
                pl.BlockSpec((tb, lane_in), lambda i: (i, 0)),        # x2 tile
                pl.BlockSpec((lane_in, lane_out), lambda i: (0, 0)),  # weight (resident)
                pl.BlockSpec((1, lane_out), lambda i: (0, 0)),        # bias   (resident)
                pl.BlockSpec((tb, lane_out), lambda i: (i, 0)),       # x3 tile
            ],
            out_specs=pl.BlockSpec((tb, lane_out), lambda i: (i, 0)),
        ),
        compiler_params=pltpu.CompilerParams(
            dimension_semantics=("parallel",)),
    )(x2p, params.w_bd, params.b_packed, x3p)

    out = outp.reshape(b_padded, f_out)
    if b_padded != B:
        out = out[:B]
    return out


if __name__ == "__main__":
    key = jax.random.PRNGKey(0)
    k1, k2, k3, k4, k5, k6 = jax.random.split(key, 6)

    F = 16
    # Deterministic Linear(16, 16) params (torch default init style U(-1/sqrt(F), 1/sqrt(F))).
    bound = 1.0 / jnp.sqrt(jnp.float32(F))
    weight = jax.random.uniform(k3, (F, F), dtype=jnp.float32, minval=-bound, maxval=bound)
    bias = jax.random.uniform(k4, (F,), dtype=jnp.float32, minval=-bound, maxval=bound)

    # One-time parameter layout prep (plain + lane-packed forms).
    params = prepare_params(weight, bias)

    def reference(a, b):
        return jnp.maximum(a @ weight.T + bias - b, 0.0)

    # 1) Spec-sized input (1, 16), forced through the Pallas kernel.
    x2 = jax.random.normal(k1, (1, F), dtype=jnp.float32)
    x3 = jax.random.normal(k2, (1, F), dtype=jnp.float32)
    out_small = model_forward(x2, x3, params, force_pallas=True)
    jax.block_until_ready(out_small)
    assert out_small.shape == (1, F)
    assert jnp.allclose(out_small, reference(x2, x3), atol=1e-5), "small-shape mismatch"

    # Also check the small-batch XLA-fusion fast path agrees.
    out_fused = model_forward(x2, x3, params)
    assert jnp.allclose(out_fused, reference(x2, x3), atol=1e-5), "fused-path mismatch"

    # 2) A ragged batch (not a multiple of 8 or the tile) exercising the
    #    lane-dense, multi-step, padded Pallas path.
    B = 4100
    x2b = jax.random.normal(k5, (B, F), dtype=jnp.float32)
    x3b = jax.random.normal(k6, (B, F), dtype=jnp.float32)
    out_big = model_forward(x2b, x3b, params)
    jax.block_until_ready(out_big)
    assert out_big.shape == (B, F)
    assert jnp.allclose(out_big, reference(x2b, x3b), atol=1e-5), "batched mismatch"

    print("KERNEL_OK")
</pallas_src>

<mosaic_0001>
module attributes {stable_mosaic.version = 11 : i64} {
  func.func @linear_sub_relu_kernel(%arg0: i32, %arg1: memref<1x128xf32, #tpu.memory_space<vmem>>, %arg2: memref<128x128xf32, #tpu.memory_space<vmem>>, %arg3: memref<1x128xf32, #tpu.memory_space<vmem>>, %arg4: memref<1x128xf32, #tpu.memory_space<vmem>>, %arg5: memref<1x128xf32, #tpu.memory_space<vmem>>) attributes {dimension_semantics = [#tpu.dimension_semantics<parallel>], iteration_bounds = array<i64: 1>, scalar_prefetch = 0 : i64, scratch_operands = 0 : i64, tpu.core_type = #tpu.core_type<tc>, window_params = [{transform_indices = @transform_0, window_bounds = array<i64: 1, 128>}, {pipeline_mode = #tpu.pipeline_mode<synchronous>, transform_indices = @transform_1, window_bounds = array<i64: 128, 128>}, {pipeline_mode = #tpu.pipeline_mode<synchronous>, transform_indices = @transform_2, window_bounds = array<i64: 1, 128>}, {transform_indices = @transform_3, window_bounds = array<i64: 1, 128>}, {transform_indices = @transform_4, window_bounds = array<i64: 1, 128>}]} {
    %c0 = arith.constant 0 : index
    %c0_0 = arith.constant 0 : index
    %0 = vector.load %arg1[%c0, %c0_0] : memref<1x128xf32, #tpu.memory_space<vmem>>, vector<1x128xf32>
    %c0_1 = arith.constant 0 : index
    %c0_2 = arith.constant 0 : index
    %1 = vector.load %arg2[%c0_1, %c0_2] : memref<128x128xf32, #tpu.memory_space<vmem>>, vector<128x128xf32>
    %cst = arith.constant dense<0.000000e+00> : vector<1x128xf32>
    %2 = tpu.matmul %0, %1, %cst {dimension_numbers = #tpu.dot_dimension_numbers<[1], [0], [0], [1], [0, 0, 1, 1], [], []>} : vector<1x128xf32>, vector<128x128xf32>, vector<1x128xf32> -> vector<1x128xf32>
    %c0_3 = arith.constant 0 : index
    %c0_4 = arith.constant 0 : index
    %3 = vector.load %arg3[%c0_3, %c0_4] : memref<1x128xf32, #tpu.memory_space<vmem>>, vector<1x128xf32>
    %4 = arith.addf %2, %3 : vector<1x128xf32>
    %c0_5 = arith.constant 0 : index
    %c0_6 = arith.constant 0 : index
    %5 = vector.load %arg4[%c0_5, %c0_6] : memref<1x128xf32, #tpu.memory_space<vmem>>, vector<1x128xf32>
    %6 = arith.subf %4, %5 : vector<1x128xf32>
    %cst_7 = arith.constant 0.000000e+00 : f32
    %7 = vector.broadcast %cst_7 : f32 to vector<1x128xf32>
    %8 = arith.maximumf %6, %7 : vector<1x128xf32>
    %c0_8 = arith.constant 0 : index
    %c0_9 = arith.constant 0 : index
    %9 = vector.load %arg5[%c0_8, %c0_9] : memref<1x128xf32, #tpu.memory_space<vmem>>, vector<1x128xf32>
    tpu.vector_store %arg5[%c0_8, %c0_9], %8 {strides = array<i32>} : memref<1x128xf32, #tpu.memory_space<vmem>>, vector<1x128xf32>,
    return
  }
  func.func @transform_0(%arg0: i32) -> (i32, i32) {
    %c0_i32 = arith.constant 0 : i32
    %c0_i32_0 = arith.constant 0 : i32
    return %arg0, %c0_i32 : i32, i32
  }
  func.func @transform_1(%arg0: i32) -> (i32, i32) {
    %c0_i32 = arith.constant 0 : i32
    %c0_i32_0 = arith.constant 0 : i32
    %c0_i32_1 = arith.constant 0 : i32
    return %c0_i32, %c0_i32_0 : i32, i32
  }
  func.func @transform_2(%arg0: i32) -> (i32, i32) {
    %c0_i32 = arith.constant 0 : i32
    %c0_i32_0 = arith.constant 0 : i32
    %c0_i32_1 = arith.constant 0 : i32
    return %c0_i32, %c0_i32_0 : i32, i32
  }
  func.func @transform_3(%arg0: i32) -> (i32, i32) {
    %c0_i32 = arith.constant 0 : i32
    %c0_i32_0 = arith.constant 0 : i32
    return %arg0, %c0_i32 : i32, i32
  }
  func.func @transform_4(%arg0: i32) -> (i32, i32) {
    %c0_i32 = arith.constant 0 : i32
    %c0_i32_0 = arith.constant 0 : i32
    return %arg0, %c0_i32 : i32, i32
  }
}

</mosaic_0001>

<llo_original>
// kernel: tpu_custom_call.1
$region0: #{tpu_custom_call.1}
  #allocation0 [shape = 'u32[]', space=smem, size = 0x4, offset = 0x4, fixed_abs, tag = 'smem constant byte address 0x4 - core index']
  #allocation1 [shape = 'u32[72,128]{1,0:T(1,128)}', space=vmem, size = 0x9000, scoped, tag = 'internal scratch']
  %s0 = inlined_call_operand.hbm [shape: f32[1,128], index: 0, kind: input, shape index: {}]
  %s1 = inlined_call_operand.hbm [shape: f32[128,128], index: 1, kind: input, shape index: {}]
  %s2 = inlined_call_operand.vmem [shape: f32[1,128], index: 2, kind: input, shape index: {}]
  %s3 = inlined_call_operand.vmem [shape: f32[1,128], index: 3, kind: input, shape index: {}]
  %s4 = inlined_call_operand.hbm [shape: f32[1,128], index: 4, kind: output, shape index: {}]
  %s5 = sld [smem:[#allocation0]]
  $region34: #{tpu_custom_call.1} parent=0
    _
  %s7 = ssub.s32 1, %s5
  %s8 = scalar_select 0, %s7, %s5
  $region1: #{tpu_custom_call.1} parent=0
    #allocation2 [shape = 'u8[512]{0}', space=vmem, size = 0x400, scoped, tag = 'input window, operand 0, single buffered']
    #allocation3 [shape = 's32[1]{0}', space=sflag, size = 0x4, scoped, tag = 'scoped memory for tpu_custom_call.1']
    #allocation4 [shape = 's32[1]{0}', space=sflag, size = 0x4, scoped, tag = 'scoped memory for tpu_custom_call.1']
    #allocation5 [shape = 'u8[65536]{0}', space=vmem, size = 0x10000, scoped, tag = 'input window, operand 1, single buffered']
    #allocation6 [shape = 's32[1]{0}', space=sflag, size = 0x4, scoped, tag = 'scoped memory for tpu_custom_call.1']
    #allocation7 [shape = 'u8[512]{0}', space=vmem, size = 0x400, scoped, tag = 'output window, operand 0, single buffered']
    %9 = vsyncpa [#allocation3], 0
    %10 = vsyncpa [#allocation6], 0
    %11 = vsyncpa [#allocation4], 0
    // Predicated region
    $region2: #{tpu_custom_call.1} parent=1 // pred_check
      _
    $region3: #{tpu_custom_call.1} parent=1 // pred_check_branch
      %13 = sbr.rel (0) target = $region5
    $region4: #{tpu_custom_call.1} parent=1 // pred_region
      %15 = vsyncadd [#allocation3], 0
      %s17 = sshll.u32 %s0, 4
      %s18 = int_to_ptr.hbm [resolvable:$true] %s17
      %s19 = sshll.u32 [#allocation2], 4
      %s20 = int_to_ptr.vmem [resolvable:$true] %s19
      %22 = dma.hbm_to_vmem [thread:$0]  %s18, 16, %s20, [#allocation3]
    $region5: #{tpu_custom_call.1} parent=1 // pred_fallthru
      _
    // Predicated region
    $region6: #{tpu_custom_call.1} parent=1 // pred_check
      _
    $region7: #{tpu_custom_call.1} parent=1 // pred_check_branch
      %24 = sbr.rel (0) target = $region9
    $region8: #{tpu_custom_call.1} parent=1 // pred_region
      %26 = vsyncadd [#allocation6], 0
      %s27 = sshll.u32 %s1, 4
      %s28 = int_to_ptr.hbm [resolvable:$true] %s27
      %s29 = sshll.u32 [#allocation5], 4
      %s30 = int_to_ptr.vmem [resolvable:$true] %s29
      %35 = dma.hbm_to_vmem [thread:$0]  %s28, 2048, %s30, [#allocation6], 128, 128, 8
    $region9: #{tpu_custom_call.1} parent=1 // pred_fallthru
      _
    // Predicated region
    $region10: #{tpu_custom_call.1} parent=1 // pred_check
      _
    $region11: #{tpu_custom_call.1} parent=1 // pred_check_branch
      %37 = sbr.rel (0) target = $region13
    $region12: #{tpu_custom_call.1} parent=1 // pred_region
      _
    $region13: #{tpu_custom_call.1} parent=1 // pred_fallthru
      _
    // Predicated region
    $region14: #{tpu_custom_call.1} parent=1 // pred_check
      _
    $region15: #{tpu_custom_call.1} parent=1 // pred_check_branch
      %39 = sbr.rel (0) target = $region17
    $region16: #{tpu_custom_call.1} parent=1 // pred_region
      _
    $region17: #{tpu_custom_call.1} parent=1 // pred_fallthru
      _
    // Predicated region
    $region18: #{tpu_custom_call.1} parent=1 // pred_check
      _
    $region19: #{tpu_custom_call.1} parent=1 // pred_check_branch
      %41 = sbr.rel (0) target = $region21
    $region20: #{tpu_custom_call.1} parent=1 // pred_region
      %43 = dma.done [#allocation3], 16
    $region21: #{tpu_custom_call.1} parent=1 // pred_fallthru
      _
    // Predicated region
    $region22: #{tpu_custom_call.1} parent=1 // pred_check
      _
    $region23: #{tpu_custom_call.1} parent=1 // pred_check_branch
      %45 = sbr.rel (0) target = $region25
    $region24: #{tpu_custom_call.1} parent=1 // pred_region
      %47 = dma.done [#allocation6], 2048
    $region25: #{tpu_custom_call.1} parent=1 // pred_fallthru
      _
    %v48 = vld [vmem:[#allocation2] sm:$0x1]
    %v49 = vld [vmem:[#allocation5] sm:$0xff]
    %v50 = vld [vmem:[#allocation5 + $0x8] sm:$0xff]
    %v51 = vld [vmem:[#allocation5 + $0x10] sm:$0xff]
    %v52 = vld [vmem:[#allocation5 + $0x18] sm:$0xff]
    %v53 = vld [vmem:[#allocation5 + $0x20] sm:$0xff]
    %v54 = vld [vmem:[#allocation5 + $0x28] sm:$0xff]
    %v55 = vld [vmem:[#allocation5 + $0x30] sm:$0xff]
    %v56 = vld [vmem:[#allocation5 + $0x38] sm:$0xff]
    %v57 = vld [vmem:[#allocation5 + $0x40] sm:$0xff]
    %v58 = vld [vmem:[#allocation5 + $0x48] sm:$0xff]
    %v59 = vld [vmem:[#allocation5 + $0x50] sm:$0xff]
    %v60 = vld [vmem:[#allocation5 + $0x58] sm:$0xff]
    %v61 = vld [vmem:[#allocation5 + $0x60] sm:$0xff]
    %v62 = vld [vmem:[#allocation5 + $0x68] sm:$0xff]
    %v63 = vld [vmem:[#allocation5 + $0x70] sm:$0xff]
    %v64 = vld [vmem:[#allocation5 + $0x78] sm:$0xff]
    %v65 = vld [vmem:[%s2] sm:$0x1]
    %66 = vmatpush.msra.mxu0 %v64
    %67 = vmatpush.msra.mxu0 %v63
    %68 = vmatpush.msra.mxu0 %v62
    %69 = vmatpush.msra.mxu0 %v61
    %70 = vmatpush.msra.mxu0 %v60
    %71 = vmatpush.msra.mxu0 %v59
    %72 = vmatpush.msra.mxu0 %v58
    %73 = vmatpush.msra.mxu0 %v57
    %74 = vmatpush.msra.mxu0 %v56
    %75 = vmatpush.msra.mxu0 %v55
    %76 = vmatpush.msra.mxu0 %v54
    %77 = vmatpush.msra.mxu0 %v53
    %78 = vmatpush.msra.mxu0 %v52
    %79 = vmatpush.msra.mxu0 %v51
    %80 = vmatpush.msra.mxu0 %v50
    %81 = vmatpush.msra.mxu0 %v49
    %82 = vmatmul.f32.gmra.mxu0 %v48
    %v83 = vpop.f32.mrf.mxu0
    %v84 = vadd.f32 %v65, %v83
    %85 = vdwg.mxu0
    %v86 = vld [vmem:[%s3] sm:$0x1]
    %v87 = vsub.f32 %v84, %v86
    %v88 = vmax.f32 %v87, 0.0
    %89 = vst [vmem:[#allocation7] sm:$0x1] %v88
    // Predicated region
    $region26: #{tpu_custom_call.1} parent=1 // pred_check
      _
    $region27: #{tpu_custom_call.1} parent=1 // pred_check_branch
      %91 = sbr.rel (0) target = $region29
    $region28: #{tpu_custom_call.1} parent=1 // pred_region
      %93 = vsyncadd [#allocation4], 0
      %s95 = sshll.u32 [#allocation7], 4
      %s96 = int_to_ptr.vmem [resolvable:$true] %s95
      %s97 = sshll.u32 %s4, 4
      %s98 = int_to_ptr.hbm [resolvable:$true] %s97
      %100 = dma.vmem_to_hbm [thread:$0]  %s96, 16, %s98, [#allocation4]
    $region29: #{tpu_custom_call.1} parent=1 // pred_fallthru
      _
    // Predicated region
    $region30: #{tpu_custom_call.1} parent=1 // pred_check
      _
    $region31: #{tpu_custom_call.1} parent=1 // pred_check_branch
      %102 = sbr.rel (0) target = $region33
    $region32: #{tpu_custom_call.1} parent=1 // pred_region
      %104 = dma.done [#allocation4], 16
    $region33: #{tpu_custom_call.1} parent=1 // pred_fallthru
      _
    %105 = vsyncpa [#allocation3], 1
    %106 = vsyncpa [#allocation6], 1
    %107 = vsyncpa [#allocation4], 1

</llo_original>
